<compile_context>
chip_gen: v6e
topology: v6e:2x2x1
jax: 0.10.0
libtpu: 0.0.40
codegen_flags: <defaults>
</compile_context>

<pallas_src>
import jax
import jax.numpy as jnp
from jax import lax
from jax.experimental import pallas as pl
from jax.experimental.pallas import tpu as pltpu

_HAS_BUFFERED = hasattr(pl, "Buffered")


def _round_up(n, m):
    return ((n + m - 1) // m) * m


def _bspec(shape, index_map, bufs=None):
    """BlockSpec with an optional pipeline depth; degrades gracefully if unsupported."""
    if bufs is not None and _HAS_BUFFERED:
        try:
            return pl.BlockSpec(shape, index_map, pipeline_mode=pl.Buffered(bufs))
        except TypeError:
            pass
    return pl.BlockSpec(shape, index_map)


def _pick_tile(B):
    """Lane-dense batch tile: 128 small, 256 mid, 512 large B; keep >= 2 tiles when B allows."""
    if B >= 1024:
        tb = 512
    elif B >= 256:
        tb = 256
    else:
        tb = 128
    while tb > 128 and (B + tb - 1) // tb < 2:
        tb //= 2
    return tb


def _vmem_limit_bytes(tb, input_dim, hidden1, hidden2, output_dim):
    """Explicit scoped-VMEM budget (the 16/32 MiB defaults reject larger tiles)."""
    f32 = 4
    weight_bytes = f32 * (hidden1 * (input_dim + 1)
                          + hidden2 * (hidden1 + 1)
                          + output_dim * (hidden2 + 1))
    stream_bytes = f32 * tb * (input_dim + output_dim)   # one x tile + one out tile
    interm_bytes = f32 * tb * (hidden1 + hidden2)        # live intermediates (may spill)
    need = 2 * weight_bytes + 3 * stream_bytes + 2 * interm_bytes + (8 << 20)
    try:
        phys = int(pltpu.get_tpu_info().vmem_capacity_bytes)
    except Exception:
        phys = 64 << 20                                   # conservative: v7x per-TC VMEM
    return int(min(max(need, 32 << 20), phys * 3 // 4))


def _make_kernel(x_batch_major):
    def kernel(x_ref, w1_ref, b1_ref, w2_ref, b2_ref, w3_ref, b3_ref, o_ref):
        # Feature-major compute: features on sublanes, batch on the 128-lane axis.
        if x_batch_major:
            # x tile is [tb, in]; contract axis 1 of both operands -> [h1, tb].
            h1 = lax.dot_general(w1_ref[...], x_ref[...],
                                 dimension_numbers=(((1,), (1,)), ((), ())),
                                 preferred_element_type=jnp.float32)
        else:
            # x tile is [in, tb] (feature-major).
            h1 = jnp.dot(w1_ref[...], x_ref[...], preferred_element_type=jnp.float32)
        h1 = jnp.maximum(h1 + b1_ref[...], 0.0)                                # [h1, tb]
        h2 = jnp.dot(w2_ref[...], h1, preferred_element_type=jnp.float32)
        h2 = jnp.maximum(h2 + b2_ref[...], 0.0)                                # [h2, tb]
        logits = jnp.dot(w3_ref[...], h2, preferred_element_type=jnp.float32)
        logits = logits + b3_ref[...]                                          # [out, tb]
        # Softmax over features (axis 0 here == PyTorch Softmax(dim=1)): sublane reduce.
        m = jnp.max(logits, axis=0, keepdims=True)
        e = jnp.exp(logits - m)
        denom = jnp.sum(e, axis=0, keepdims=True)
        # Exact reciprocal keeps ~1e-7 relative accuracy for the 1e-5 fidelity check.
        o_ref[...] = (e * pl.reciprocal(denom, approx=False)).astype(o_ref.dtype)
    return kernel


def hallucination_baseline_nn(x, w1, b1, w2, b2, w3, b3, *, tb=None, use_pallas=None):
    """Forward pass of HallucinationBaselineNN.

    x : [B, input_dim] float32
    wN: [out_features, in_features] (PyTorch nn.Linear layout);  bN: [out_features]
    Returns softmax(fc3(relu(fc2(relu(fc1(x))))), dim=1) of shape [B, output_dim].
    """
    B, input_dim = x.shape
    hidden1, hidden2, output_dim = w1.shape[0], w2.shape[0], w3.shape[0]

    if use_pallas is None:
        use_pallas = B > 128
    if not use_pallas:
        # Tiny batch: a fused XLA forward beats pad/transpose plumbing + kernel launch.
        h1 = jnp.maximum(x @ w1.T + b1, 0.0)
        h2 = jnp.maximum(h1 @ w2.T + b2, 0.0)
        return jax.nn.softmax(h2 @ w3.T + b3, axis=1)

    if tb is None:
        tb = _pick_tile(B)
    tb = max(128, _round_up(tb, 128))
    b_pad = _round_up(B, tb)
    grid = (b_pad // tb,)

    # Batch-major x avoids the wrapper-side pad+transpose HBM passes, but its VMEM tile is
    # only lane-dense when input_dim is a multiple of 128; otherwise keep feature-major.
    x_batch_major = (input_dim % 128 == 0)
    if x_batch_major:
        x_in = jnp.pad(x, ((0, b_pad - B), (0, 0)))                    # [b_pad, in]
        x_shape, x_imap = (tb, input_dim), (lambda i: (i, 0))
    else:
        x_in = jnp.pad(x, ((0, b_pad - B), (0, 0))).T                  # [in, b_pad]
        x_shape, x_imap = (input_dim, tb), (lambda i: (0, i))

    # Biases as columns so they broadcast along the lane (batch) axis.
    b1c = b1.reshape(hidden1, 1)
    b2c = b2.reshape(hidden2, 1)
    b3c = b3.reshape(output_dim, 1)

    flops = 2 * b_pad * (input_dim * hidden1 + hidden1 * hidden2 + hidden2 * output_dim)
    bytes_accessed = 4 * (b_pad * (input_dim + output_dim)
                          + hidden1 * (input_dim + 1)
                          + hidden2 * (hidden1 + 1)
                          + output_dim * (hidden2 + 1))
    cost = pl.CostEstimate(flops=flops, transcendentals=b_pad * output_dim,
                           bytes_accessed=bytes_accessed)

    kernel = _make_kernel(x_batch_major)
    vmem_limit = _vmem_limit_bytes(tb, input_dim, hidden1, hidden2, output_dim)

    def run(pipelined):
        x_bufs, w_bufs, o_bufs = (3, 1, 3) if pipelined else (None, None, None)
        return pl.pallas_call(
            kernel,
            out_shape=jax.ShapeDtypeStruct((output_dim, b_pad), jnp.float32),
            grid_spec=pltpu.PrefetchScalarGridSpec(
                num_scalar_prefetch=0,
                grid=grid,
                in_specs=[
                    # Streamed activation tile: deeper buffering hides DMA latency.
                    _bspec(x_shape, x_imap, x_bufs),
                    # Grid-invariant weights/biases: single-buffered (DMA'd once).
                    _bspec((hidden1, input_dim), lambda i: (0, 0), w_bufs),
                    _bspec((hidden1, 1), lambda i: (0, 0), w_bufs),
                    _bspec((hidden2, hidden1), lambda i: (0, 0), w_bufs),
                    _bspec((hidden2, 1), lambda i: (0, 0), w_bufs),
                    _bspec((output_dim, hidden2), lambda i: (0, 0), w_bufs),
                    _bspec((output_dim, 1), lambda i: (0, 0), w_bufs),
                ],
                out_specs=_bspec((output_dim, tb), lambda i: (0, i), o_bufs),
            ),
            compiler_params=pltpu.CompilerParams(
                dimension_semantics=("parallel",),
                vmem_limit_bytes=vmem_limit,
            ),
            cost_estimate=cost,
        )(x_in, w1, b1c, w2, b2c, w3, b3c)

    if _HAS_BUFFERED:
        try:
            outT = run(True)
        except Exception:
            # Stricter lowerings: fall back to default double-buffering everywhere.
            outT = run(False)
    else:
        outT = run(False)

    # Layout plumbing back to the PyTorch [B, output_dim] convention (out slab is small).
    return outT[:, :B].T


def init_linear(key, fan_in, fan_out):
    # Mirrors torch.nn.Linear's U(-1/sqrt(fan_in), 1/sqrt(fan_in)), PyTorch layout.
    kw, kb = jax.random.split(key)
    bound = 1.0 / jnp.sqrt(fan_in)
    w = jax.random.uniform(kw, (fan_out, fan_in), jnp.float32, -bound, bound)  # [out, in]
    b = jax.random.uniform(kb, (fan_out,), jnp.float32, -bound, bound)
    return w, b


def reference_forward(x, w1, b1, w2, b2, w3, b3):
    h1 = jnp.maximum(x @ w1.T + b1, 0.0)
    h2 = jnp.maximum(h1 @ w2.T + b2, 0.0)
    return jax.nn.softmax(h2 @ w3.T + b3, axis=1)


def _check(out, ref, atol, rtol):
    assert out.shape == ref.shape
    assert jnp.allclose(out, ref, atol=atol, rtol=rtol), "mismatch vs JAX reference"
    assert jnp.allclose(jnp.sum(out, axis=1), 1.0, atol=1e-5)


if __name__ == "__main__":
    key = jax.random.PRNGKey(0)

    # Case 1: the module's small demo shapes, forced through the Pallas path
    # (feature-major x, grid=(1,)).
    batch, input_dim, h1d, h2d, out_dim = 8, 32, 64, 32, 8
    kx, k1, k2, k3, key = jax.random.split(key, 5)
    x = jax.random.normal(kx, (batch, input_dim), dtype=jnp.float32)
    w1, b1 = init_linear(k1, input_dim, h1d)
    w2, b2 = init_linear(k2, h1d, h2d)
    w3, b3 = init_linear(k3, h2d, out_dim)
    out = jax.block_until_ready(
        hallucination_baseline_nn(x, w1, b1, w2, b2, w3, b3, use_pallas=True))
    _check(out, reference_forward(x, w1, b1, w2, b2, w3, b3), atol=1e-5, rtol=1e-5)

    # Case 2: larger ragged batch -> default Pallas path, tb=256, padded to two tiles,
    # "parallel" batch grid.
    kx2, key = jax.random.split(key)
    x2 = jax.random.normal(kx2, (300, input_dim), dtype=jnp.float32)
    out2 = jax.block_until_ready(hallucination_baseline_nn(x2, w1, b1, w2, b2, w3, b3))
    _check(out2, reference_forward(x2, w1, b1, w2, b2, w3, b3), atol=1e-5, rtol=1e-5)

    # Case 3: input_dim multiple of 128 -> batch-major x path (no wrapper pad+transpose),
    # two 128-wide batch tiles.
    kx3, k4, k5, k6, key = jax.random.split(key, 5)
    in3, h13, h23, out3d, batch3 = 128, 64, 48, 10, 256
    x3 = jax.random.normal(kx3, (batch3, in3), dtype=jnp.float32)
    w1c, b1v = init_linear(k4, in3, h13)
    w2c, b2v = init_linear(k5, h13, h23)
    w3c, b3v = init_linear(k6, h23, out3d)
    out3 = jax.block_until_ready(
        hallucination_baseline_nn(x3, w1c, b1v, w2c, b2v, w3c, b3v))
    _check(out3, reference_forward(x3, w1c, b1v, w2c, b2v, w3c, b3v), atol=5e-5, rtol=5e-5)

    print("KERNEL_OK")
</pallas_src>

<mosaic_0001>
module attributes {stable_mosaic.version = 11 : i64} {
  func.func @kernel(%arg0: i32, %arg1: memref<32x128xf32, #tpu.memory_space<vmem>>, %arg2: memref<64x32xf32, #tpu.memory_space<vmem>>, %arg3: memref<64x1xf32, #tpu.memory_space<vmem>>, %arg4: memref<32x64xf32, #tpu.memory_space<vmem>>, %arg5: memref<32x1xf32, #tpu.memory_space<vmem>>, %arg6: memref<8x32xf32, #tpu.memory_space<vmem>>, %arg7: memref<8x1xf32, #tpu.memory_space<vmem>>, %arg8: memref<8x128xf32, #tpu.memory_space<vmem>>) attributes {dimension_semantics = [#tpu.dimension_semantics<parallel>], iteration_bounds = array<i64: 1>, scalar_prefetch = 0 : i64, scratch_operands = 0 : i64, tpu.core_type = #tpu.core_type<tc>, window_params = [{transform_indices = @transform_0, window_bounds = array<i64: 32, 128>}, {pipeline_mode = #tpu.pipeline_mode<synchronous>, transform_indices = @transform_1, window_bounds = array<i64: 64, 32>}, {pipeline_mode = #tpu.pipeline_mode<synchronous>, transform_indices = @transform_2, window_bounds = array<i64: 64, 1>}, {pipeline_mode = #tpu.pipeline_mode<synchronous>, transform_indices = @transform_3, window_bounds = array<i64: 32, 64>}, {pipeline_mode = #tpu.pipeline_mode<synchronous>, transform_indices = @transform_4, window_bounds = array<i64: 32, 1>}, {pipeline_mode = #tpu.pipeline_mode<synchronous>, transform_indices = @transform_5, window_bounds = array<i64: 8, 32>}, {pipeline_mode = #tpu.pipeline_mode<synchronous>, transform_indices = @transform_6, window_bounds = array<i64: 8, 1>}, {transform_indices = @transform_7, window_bounds = array<i64: 8, 128>}]} {
    %c0 = arith.constant 0 : index
    %c0_0 = arith.constant 0 : index
    %0 = vector.load %arg2[%c0, %c0_0] : memref<64x32xf32, #tpu.memory_space<vmem>>, vector<64x32xf32>
    %c0_1 = arith.constant 0 : index
    %c0_2 = arith.constant 0 : index
    %1 = vector.load %arg1[%c0_1, %c0_2] : memref<32x128xf32, #tpu.memory_space<vmem>>, vector<32x128xf32>
    %cst = arith.constant dense<0.000000e+00> : vector<64x128xf32>
    %2 = tpu.matmul %0, %1, %cst {dimension_numbers = #tpu.dot_dimension_numbers<[1], [0], [0], [1], [0, 0, 1, 1], [], []>} : vector<64x32xf32>, vector<32x128xf32>, vector<64x128xf32> -> vector<64x128xf32>
    %c0_3 = arith.constant 0 : index
    %c0_4 = arith.constant 0 : index
    %3 = vector.load %arg3[%c0_3, %c0_4] : memref<64x1xf32, #tpu.memory_space<vmem>>, vector<64x1xf32>
    %4 = vector.broadcast %3 : vector<64x1xf32> to vector<64x128xf32>
    %5 = arith.addf %2, %4 : vector<64x128xf32>
    %cst_5 = arith.constant 0.000000e+00 : f32
    %6 = vector.broadcast %cst_5 : f32 to vector<64x128xf32>
    %7 = arith.maximumf %5, %6 : vector<64x128xf32>
    %c0_6 = arith.constant 0 : index
    %c0_7 = arith.constant 0 : index
    %8 = vector.load %arg4[%c0_6, %c0_7] : memref<32x64xf32, #tpu.memory_space<vmem>>, vector<32x64xf32>
    %cst_8 = arith.constant dense<0.000000e+00> : vector<32x128xf32>
    %9 = tpu.matmul %8, %7, %cst_8 {dimension_numbers = #tpu.dot_dimension_numbers<[1], [0], [0], [1], [0, 0, 1, 1], [], []>} : vector<32x64xf32>, vector<64x128xf32>, vector<32x128xf32> -> vector<32x128xf32>
    %c0_9 = arith.constant 0 : index
    %c0_10 = arith.constant 0 : index
    %10 = vector.load %arg5[%c0_9, %c0_10] : memref<32x1xf32, #tpu.memory_space<vmem>>, vector<32x1xf32>
    %11 = vector.broadcast %10 : vector<32x1xf32> to vector<32x128xf32>
    %12 = arith.addf %9, %11 : vector<32x128xf32>
    %cst_11 = arith.constant 0.000000e+00 : f32
    %13 = vector.broadcast %cst_11 : f32 to vector<32x128xf32>
    %14 = arith.maximumf %12, %13 : vector<32x128xf32>
    %c0_12 = arith.constant 0 : index
    %c0_13 = arith.constant 0 : index
    %15 = vector.load %arg6[%c0_12, %c0_13] : memref<8x32xf32, #tpu.memory_space<vmem>>, vector<8x32xf32>
    %cst_14 = arith.constant dense<0.000000e+00> : vector<8x128xf32>
    %16 = tpu.matmul %15, %14, %cst_14 {dimension_numbers = #tpu.dot_dimension_numbers<[1], [0], [0], [1], [0, 0, 1, 1], [], []>} : vector<8x32xf32>, vector<32x128xf32>, vector<8x128xf32> -> vector<8x128xf32>
    %c0_15 = arith.constant 0 : index
    %c0_16 = arith.constant 0 : index
    %17 = vector.load %arg7[%c0_15, %c0_16] : memref<8x1xf32, #tpu.memory_space<vmem>>, vector<8x1xf32>
    %18 = vector.broadcast %17 : vector<8x1xf32> to vector<8x128xf32>
    %19 = arith.addf %16, %18 : vector<8x128xf32>
    %cst_17 = arith.constant dense<0xFF800000> : vector<128xf32>
    %20 = vector.multi_reduction <maximumf>, %19, %cst_17 [0] : vector<8x128xf32> to vector<128xf32>
    %21 = vector.shape_cast %20 : vector<128xf32> to vector<1x128xf32>
    %22 = vector.broadcast %21 : vector<1x128xf32> to vector<8x128xf32>
    %23 = arith.subf %19, %22 : vector<8x128xf32>
    %24 = math.exp %23 : vector<8x128xf32>
    %cst_18 = arith.constant dense<0.000000e+00> : vector<128xf32>
    %25 = vector.multi_reduction <add>, %24, %cst_18 [0] : vector<8x128xf32> to vector<128xf32>
    %26 = vector.shape_cast %25 : vector<128xf32> to vector<1x128xf32>
    %27 = tpu.reciprocal %26 : vector<1x128xf32> -> vector<1x128xf32>
    %28 = vector.broadcast %27 : vector<1x128xf32> to vector<8x128xf32>
    %29 = arith.mulf %24, %28 : vector<8x128xf32>
    %c0_19 = arith.constant 0 : index
    %c0_20 = arith.constant 0 : index
    %30 = vector.load %arg8[%c0_19, %c0_20] : memref<8x128xf32, #tpu.memory_space<vmem>>, vector<8x128xf32>
    tpu.vector_store %arg8[%c0_19, %c0_20], %29 {strides = array<i32>} : memref<8x128xf32, #tpu.memory_space<vmem>>, vector<8x128xf32>,
    return
  }
  func.func @transform_0(%arg0: i32) -> (i32, i32) {
    %c0_i32 = arith.constant 0 : i32
    %c0_i32_0 = arith.constant 0 : i32
    return %c0_i32, %arg0 : i32, i32
  }
  func.func @transform_1(%arg0: i32) -> (i32, i32) {
    %c0_i32 = arith.constant 0 : i32
    %c0_i32_0 = arith.constant 0 : i32
    %c0_i32_1 = arith.constant 0 : i32
    return %c0_i32, %c0_i32_0 : i32, i32
  }
  func.func @transform_2(%arg0: i32) -> (i32, i32) {
    %c0_i32 = arith.constant 0 : i32
    %c0_i32_0 = arith.constant 0 : i32
    %c0_i32_1 = arith.constant 0 : i32
    return %c0_i32, %c0_i32_0 : i32, i32
  }
  func.func @transform_3(%arg0: i32) -> (i32, i32) {
    %c0_i32 = arith.constant 0 : i32
    %c0_i32_0 = arith.constant 0 : i32
    %c0_i32_1 = arith.constant 0 : i32
    return %c0_i32, %c0_i32_0 : i32, i32
  }
  func.func @transform_4(%arg0: i32) -> (i32, i32) {
    %c0_i32 = arith.constant 0 : i32
    %c0_i32_0 = arith.constant 0 : i32
    %c0_i32_1 = arith.constant 0 : i32
    return %c0_i32, %c0_i32_0 : i32, i32
  }
  func.func @transform_5(%arg0: i32) -> (i32, i32) {
    %c0_i32 = arith.constant 0 : i32
    %c0_i32_0 = arith.constant 0 : i32
    %c0_i32_1 = arith.constant 0 : i32
    return %c0_i32, %c0_i32_0 : i32, i32
  }
  func.func @transform_6(%arg0: i32) -> (i32, i32) {
    %c0_i32 = arith.constant 0 : i32
    %c0_i32_0 = arith.constant 0 : i32
    %c0_i32_1 = arith.constant 0 : i32
    return %c0_i32, %c0_i32_0 : i32, i32
  }
  func.func @transform_7(%arg0: i32) -> (i32, i32) {
    %c0_i32 = arith.constant 0 : i32
    %c0_i32_0 = arith.constant 0 : i32
    return %c0_i32, %arg0 : i32, i32
  }
}

</mosaic_0001>

<llo_original>
// kernel: tpu_custom_call.1
$region0: #{tpu_custom_call.1}
  #allocation0 [shape = 'u32[]', space=smem, size = 0x4, offset = 0x4, fixed_abs, tag = 'smem constant byte address 0x4 - core index']
  #allocation1 [shape = 'u32[144,128]{1,0:T(1,128)}', space=vmem, size = 0x12000, scoped, tag = 'internal scratch']
  %s0 = inlined_call_operand.vmem [shape: f32[32,128], index: 0, kind: input, shape index: {}]
  %s1 = inlined_call_operand.vmem [shape: f32[64,32], index: 1, kind: input, shape index: {}]
  %s2 = inlined_call_operand.vmem [shape: f32[64,1], index: 2, kind: input, shape index: {}]
  %s3 = inlined_call_operand.vmem [shape: f32[32,64], index: 3, kind: input, shape index: {}]
  %s4 = inlined_call_operand.vmem [shape: f32[32,1], index: 4, kind: input, shape index: {}]
  %s5 = inlined_call_operand.vmem [shape: f32[8,32], index: 5, kind: input, shape index: {}]
  %s6 = inlined_call_operand.vmem [shape: f32[8,1], index: 6, kind: input, shape index: {}]
  %s7 = inlined_call_operand.hbm [shape: f32[8,128], index: 7, kind: output, shape index: {}]
  %s8 = sld [smem:[#allocation0]]
  $region38: #{tpu_custom_call.1} parent=0
    _
  %s10 = ssub.s32 1, %s8
  %s11 = scalar_select 0, %s10, %s8
  $region1: #{tpu_custom_call.1} parent=0
    #allocation2 [shape = 'u8[4096]{0}', space=vmem, size = 0x1000, scoped, tag = 'output window, operand 0, single buffered']
    #allocation3 [shape = 's32[1]{0}', space=sflag, size = 0x4, scoped, tag = 'scoped memory for tpu_custom_call.1']
    %12 = vsyncpa [#allocation3], 0
    // Predicated region
    $region2: #{tpu_custom_call.1} parent=1 // pred_check
      _
    $region3: #{tpu_custom_call.1} parent=1 // pred_check_branch
      %14 = sbr.rel (0) target = $region5
    $region4: #{tpu_custom_call.1} parent=1 // pred_region
      _
    $region5: #{tpu_custom_call.1} parent=1 // pred_fallthru
      _
    // Predicated region
    $region6: #{tpu_custom_call.1} parent=1 // pred_check
      _
    $region7: #{tpu_custom_call.1} parent=1 // pred_check_branch
      %16 = sbr.rel (0) target = $region9
    $region8: #{tpu_custom_call.1} parent=1 // pred_region
      _
    $region9: #{tpu_custom_call.1} parent=1 // pred_fallthru
      _
    // Predicated region
    $region10: #{tpu_custom_call.1} parent=1 // pred_check
      _
    $region11: #{tpu_custom_call.1} parent=1 // pred_check_branch
      %18 = sbr.rel (0) target = $region13
    $region12: #{tpu_custom_call.1} parent=1 // pred_region
      _
    $region13: #{tpu_custom_call.1} parent=1 // pred_fallthru
      _
    // Predicated region
    $region14: #{tpu_custom_call.1} parent=1 // pred_check
      _
    $region15: #{tpu_custom_call.1} parent=1 // pred_check_branch
      %20 = sbr.rel (0) target = $region17
    $region16: #{tpu_custom_call.1} parent=1 // pred_region
      _
    $region17: #{tpu_custom_call.1} parent=1 // pred_fallthru
      _
    // Predicated region
    $region18: #{tpu_custom_call.1} parent=1 // pred_check
      _
    $region19: #{tpu_custom_call.1} parent=1 // pred_check_branch
      %22 = sbr.rel (0) target = $region21
    $region20: #{tpu_custom_call.1} parent=1 // pred_region
      _
    $region21: #{tpu_custom_call.1} parent=1 // pred_fallthru
      _
    // Predicated region
    $region22: #{tpu_custom_call.1} parent=1 // pred_check
      _
    $region23: #{tpu_custom_call.1} parent=1 // pred_check_branch
      %24 = sbr.rel (0) target = $region25
    $region24: #{tpu_custom_call.1} parent=1 // pred_region
      _
    $region25: #{tpu_custom_call.1} parent=1 // pred_fallthru
      _
    // Predicated region
    $region26: #{tpu_custom_call.1} parent=1 // pred_check
      _
    $region27: #{tpu_custom_call.1} parent=1 // pred_check_branch
      %26 = sbr.rel (0) target = $region29
    $region28: #{tpu_custom_call.1} parent=1 // pred_region
      _
    $region29: #{tpu_custom_call.1} parent=1 // pred_fallthru
      _
    %v27 = vld [vmem:[%s1] sm:$0xff]
    %v28 = vld [vmem:[%s1 + $0x8] sm:$0xff]
    %v29 = vld [vmem:[%s1 + $0x10] sm:$0xff]
    %v30 = vld [vmem:[%s1 + $0x18] sm:$0xff]
    %v31 = vld [vmem:[%s1 + $0x20] sm:$0xff]
    %v32 = vld [vmem:[%s1 + $0x28] sm:$0xff]
    %v33 = vld [vmem:[%s1 + $0x30] sm:$0xff]
    %v34 = vld [vmem:[%s1 + $0x38] sm:$0xff]
    %v35 = vld [vmem:[%s0] sm:$0xff]
    %v36 = vld [vmem:[%s0 + $0x8] sm:$0xff]
    %v37 = vld [vmem:[%s0 + $0x10] sm:$0xff]
    %v38 = vld [vmem:[%s0 + $0x18] sm:$0xff]
    %v39 = vld [vmem:[%s2] sm:$0xff]
    %v40 = vld [vmem:[%s2 + $0x8] sm:$0xff]
    %v41 = vld [vmem:[%s2 + $0x10] sm:$0xff]
    %v42 = vld [vmem:[%s2 + $0x18] sm:$0xff]
    %v43 = vld [vmem:[%s2 + $0x20] sm:$0xff]
    %v44 = vld [vmem:[%s2 + $0x28] sm:$0xff]
    %v45 = vld [vmem:[%s2 + $0x30] sm:$0xff]
    %v46 = vld [vmem:[%s2 + $0x38] sm:$0xff]
    %48 = vset.pattern.permute.xlu0 0
    %49 = vperm.xlu0 %48, %v39
    %v50 = vpop.permute.xlu0 %49
    %53 = vset.pattern.permute.xlu0 0
    %54 = vperm.xlu0 %53, %v40
    %v55 = vpop.permute.xlu0 %54
    %58 = vset.pattern.permute.xlu0 0
    %59 = vperm.xlu0 %58, %v41
    %v60 = vpop.permute.xlu0 %59
    %63 = vset.pattern.permute.xlu0 0
    %64 = vperm.xlu0 %63, %v42
    %v65 = vpop.permute.xlu0 %64
    %68 = vset.pattern.permute.xlu0 0
    %69 = vperm.xlu0 %68, %v43
    %v70 = vpop.permute.xlu0 %69
    %73 = vset.pattern.permute.xlu0 0
    %74 = vperm.xlu0 %73, %v44
    %v75 = vpop.permute.xlu0 %74
    %78 = vset.pattern.permute.xlu0 0
    %79 = vperm.xlu0 %78, %v45
    %v80 = vpop.permute.xlu0 %79
    %83 = vset.pattern.permute.xlu0 0
    %84 = vperm.xlu0 %83, %v46
    %v85 = vpop.permute.xlu0 %84
    %vm87 = vcmask 261120
    %v89 = vsel %vm87, %v27, 0
    %v92 = vsel %vm87, %v28, 0
    %v95 = vsel %vm87, %v29, 0
    %v98 = vsel %vm87, %v30, 0
    %v101 = vsel %vm87, %v31, 0
    %v104 = vsel %vm87, %v32, 0
    %v107 = vsel %vm87, %v33, 0
    %v110 = vsel %vm87, %v34, 0
    %112 = vmatprep.subr.mxu0 0.0
    %113 = vmatpush1.msra.mxu0 0.0
    %114 = vmatprep.subr.mxu0 0.0
    %115 = vmatpush1.msra.mxu0 0.0
    %116 = vmatprep.subr.mxu0 0.0
    %117 = vmatpush1.msra.mxu0 0.0
    %118 = vmatprep.subr.mxu0 0.0
    %119 = vmatpush1.msra.mxu0 0.0
    %120 = vmatprep.subr.mxu0 0.0
    %121 = vmatpush1.msra.mxu0 0.0
    %122 = vmatprep.subr.mxu0 0.0
    %123 = vmatpush1.msra.mxu0 0.0
    %124 = vmatprep.subr.mxu0 0.0
    %125 = vmatpush1.msra.mxu0 0.0
    %126 = vmatprep.subr.mxu0 0.0
    %127 = vmatpush1.msra.mxu0 0.0
    %128 = vmatprep.subr.mxu0 0.0
    %129 = vmatpush1.msra.mxu0 0.0
    %130 = vmatprep.subr.mxu0 0.0
    %131 = vmatpush1.msra.mxu0 0.0
    %132 = vmatprep.subr.mxu0 0.0
    %133 = vmatpush1.msra.mxu0 0.0
    %134 = vmatprep.subr.mxu0 0.0
    %135 = vmatpush1.msra.mxu0 0.0
    %136 = vmatprep.subr.mxu0 0.0
    %137 = vmatpush1.msra.mxu0 %v38
    %138 = vmatprep.subr.mxu0 0.0
    %139 = vmatpush1.msra.mxu0 %v37
    %140 = vmatprep.subr.mxu0 0.0
    %141 = vmatpush1.msra.mxu0 %v36
    %142 = vmatprep.subr.mxu0 0.0
    %143 = vmatpush1.msra.mxu0 %v35
    %144 = vmatprep.subr.mxu0 0.0
    %145 = vmatpush2.msra.mxu0 0.0
    %146 = vmatprep.subr.mxu0 0.0
    %147 = vmatpush2.msra.mxu0 0.0
    %148 = vmatprep.subr.mxu0 0.0
    %149 = vmatpush2.msra.mxu0 0.0
    %150 = vmatprep.subr.mxu0 0.0
    %151 = vmatpush2.msra.mxu0 0.0
    %152 = vmatprep.subr.mxu0 0.0
    %153 = vmatpush2.msra.mxu0 0.0
    %154 = vmatprep.subr.mxu0 0.0
    %155 = vmatpush2.msra.mxu0 0.0
    %156 = vmatprep.subr.mxu0 0.0
    %157 = vmatpush2.msra.mxu0 0.0
    %158 = vmatprep.subr.mxu0 0.0
    %159 = vmatpush2.msra.mxu0 0.0
    %160 = vmatprep.subr.mxu0 0.0
    %161 = vmatpush2.msra.mxu0 0.0
    %162 = vmatprep.subr.mxu0 0.0
    %163 = vmatpush2.msra.mxu0 0.0
    %164 = vmatprep.subr.mxu0 0.0
    %165 = vmatpush2.msra.mxu0 0.0
    %166 = vmatprep.subr.mxu0 0.0
    %167 = vmatpush2.msra.mxu0 0.0
    %168 = vmatprep.subr.mxu0 0.0
    %169 = vmatpush2.msra.mxu0 0.0
    %170 = vmatprep.subr.mxu0 0.0
    %171 = vmatpush2.msra.mxu0 0.0
    %172 = vmatprep.subr.mxu0 0.0
    %173 = vmatpush2.msra.mxu0 0.0
    %174 = vmatprep.subr.mxu0 0.0
    %175 = vmatpush2.msra.mxu0 0.0
    %176 = vmatprep.mubr.f32.mxu0 0.0
    %177 = vmatmul.mubr.f32.gmra.mxu0 %v89
    %v178 = vpop.f32.mrf.mxu0
    %v179 = vadd.f32 %v50, %v178
    %v180 = vpop.f32.mrf.mxu0
    %181 = vmatprep.mubr.f32.mxu0 0.0
    %182 = vmatmul.mubr.f32.gmra.mxu0 %v92
    %v183 = vpop.f32.mrf.mxu0
    %v184 = vadd.f32 %v55, %v183
    %v185 = vpop.f32.mrf.mxu0
    %186 = vmatprep.mubr.f32.mxu0 0.0
    %187 = vmatmul.mubr.f32.gmra.mxu0 %v95
    %v188 = vpop.f32.mrf.mxu0
    %v189 = vadd.f32 %v60, %v188
    %v190 = vpop.f32.mrf.mxu0
    %191 = vmatprep.mubr.f32.mxu0 0.0
    %192 = vmatmul.mubr.f32.gmra.mxu0 %v98
    %v193 = vpop.f32.mrf.mxu0
    %v194 = vadd.f32 %v65, %v193
    %v195 = vpop.f32.mrf.mxu0
    %196 = vmatprep.mubr.f32.mxu0 0.0
    %197 = vmatmul.mubr.f32.gmra.mxu0 %v101
    %v198 = vpop.f32.mrf.mxu0
    %v199 = vadd.f32 %v70, %v198
    %v200 = vpop.f32.mrf.mxu0
    %201 = vmatprep.mubr.f32.mxu0 0.0
    %202 = vmatmul.mubr.f32.gmra.mxu0 %v104
    %v203 = vpop.f32.mrf.mxu0
    %v204 = vadd.f32 %v75, %v203
    %v205 = vpop.f32.mrf.mxu0
    %206 = vmatprep.mubr.f32.mxu0 0.0
    %207 = vmatmul.mubr.f32.gmra.mxu0 %v107
    %v208 = vpop.f32.mrf.mxu0
    %v209 = vadd.f32 %v80, %v208
    %v210 = vpop.f32.mrf.mxu0
    %211 = vmatprep.mubr.f32.mxu0 0.0
    %212 = vmatmul.mubr.f32.gmra.mxu0 %v110
    %v213 = vpop.f32.mrf.mxu0
    %v214 = vadd.f32 %v85, %v213
    %v215 = vpop.f32.mrf.mxu0
    %216 = vdwg.mxu0
    %v217 = vmax.f32 %v179, 0.0
    %v218 = vmax.f32 %v184, 0.0
    %v219 = vmax.f32 %v189, 0.0
    %v220 = vmax.f32 %v194, 0.0
    %v221 = vmax.f32 %v199, 0.0
    %v222 = vmax.f32 %v204, 0.0
    %v223 = vmax.f32 %v209, 0.0
    %v224 = vmax.f32 %v214, 0.0
    %v225 = vld [vmem:[%s3] sm:$0xff]
    %v226 = vld [vmem:[%s3 + $0x8] sm:$0xff]
    %v227 = vld [vmem:[%s3 + $0x10] sm:$0xff]
    %v228 = vld [vmem:[%s3 + $0x18] sm:$0xff]
    %v229 = vld [vmem:[%s4] sm:$0xff]
    %v230 = vld [vmem:[%s4 + $0x8] sm:$0xff]
    %v231 = vld [vmem:[%s4 + $0x10] sm:$0xff]
    %v232 = vld [vmem:[%s4 + $0x18] sm:$0xff]
    %234 = vset.pattern.permute.xlu0 0
    %235 = vperm.xlu0 %234, %v229
    %v236 = vpop.permute.xlu0 %235
    %239 = vset.pattern.permute.xlu0 0
    %240 = vperm.xlu0 %239, %v230
    %v241 = vpop.permute.xlu0 %240
    %244 = vset.pattern.permute.xlu0 0
    %245 = vperm.xlu0 %244, %v231
    %v246 = vpop.permute.xlu0 %245
    %249 = vset.pattern.permute.xlu0 0
    %250 = vperm.xlu0 %249, %v232
    %v251 = vpop.permute.xlu0 %250
    %vm253 = vcmask 523264
    %v255 = vsel %vm253, %v225, 0
    %v258 = vsel %vm253, %v226, 0
    %v261 = vsel %vm253, %v227, 0
    %v264 = vsel %vm253, %v228, 0
    %266 = vmatprep.subr.mxu0 0.0
    %267 = vmatpush1.msra.mxu0 0.0
    %268 = vmatprep.subr.mxu0 0.0
    %269 = vmatpush1.msra.mxu0 0.0
    %270 = vmatprep.subr.mxu0 0.0
    %271 = vmatpush1.msra.mxu0 0.0
    %272 = vmatprep.subr.mxu0 0.0
    %273 = vmatpush1.msra.mxu0 0.0
    %274 = vmatprep.subr.mxu0 0.0
    %275 = vmatpush1.msra.mxu0 0.0
    %276 = vmatprep.subr.mxu0 0.0
    %277 = vmatpush1.msra.mxu0 0.0
    %278 = vmatprep.subr.mxu0 0.0
    %279 = vmatpush1.msra.mxu0 0.0
    %280 = vmatprep.subr.mxu0 0.0
    %281 = vmatpush1.msra.mxu0 0.0
    %282 = vmatprep.subr.mxu0 0.0
    %283 = vmatpush1.msra.mxu0 %v224
    %284 = vmatprep.subr.mxu0 0.0
    %285 = vmatpush1.msra.mxu0 %v223
    %286 = vmatprep.subr.mxu0 0.0
    %287 = vmatpush1.msra.mxu0 %v222
    %288 = vmatprep.subr.mxu0 0.0
    %289 = vmatpush1.msra.mxu0 %v221
    %290 = vmatprep.subr.mxu0 0.0
    %291 = vmatpush1.msra.mxu0 %v220
    %292 = vmatprep.subr.mxu0 0.0
    %293 = vmatpush1.msra.mxu0 %v219
    %294 = vmatprep.subr.mxu0 0.0
    %295 = vmatpush1.msra.mxu0 %v218
    %296 = vmatprep.subr.mxu0 0.0
    %297 = vmatpush1.msra.mxu0 %v217
    %298 = vmatprep.subr.mxu0 0.0
    %299 = vmatpush2.msra.mxu0 0.0
    %300 = vmatprep.subr.mxu0 0.0
    %301 = vmatpush2.msra.mxu0 0.0
    %302 = vmatprep.subr.mxu0 0.0
    %303 = vmatpush2.msra.mxu0 0.0
    %304 = vmatprep.subr.mxu0 0.0
    %305 = vmatpush2.msra.mxu0 0.0
    %306 = vmatprep.subr.mxu0 0.0
    %307 = vmatpush2.msra.mxu0 0.0
    %308 = vmatprep.subr.mxu0 0.0
    %309 = vmatpush2.msra.mxu0 0.0
    %310 = vmatprep.subr.mxu0 0.0
    %311 = vmatpush2.msra.mxu0 0.0
    %312 = vmatprep.subr.mxu0 0.0
    %313 = vmatpush2.msra.mxu0 0.0
    %314 = vmatprep.subr.mxu0 0.0
    %315 = vmatpush2.msra.mxu0 0.0
    %316 = vmatprep.subr.mxu0 0.0
    %317 = vmatpush2.msra.mxu0 0.0
    %318 = vmatprep.subr.mxu0 0.0
    %319 = vmatpush2.msra.mxu0 0.0
    %320 = vmatprep.subr.mxu0 0.0
    %321 = vmatpush2.msra.mxu0 0.0
    %322 = vmatprep.subr.mxu0 0.0
    %323 = vmatpush2.msra.mxu0 0.0
    %324 = vmatprep.subr.mxu0 0.0
    %325 = vmatpush2.msra.mxu0 0.0
    %326 = vmatprep.subr.mxu0 0.0
    %327 = vmatpush2.msra.mxu0 0.0
    %328 = vmatprep.subr.mxu0 0.0
    %329 = vmatpush2.msra.mxu0 0.0
    %330 = vmatprep.mubr.f32.mxu0 0.0
    %331 = vmatmul.mubr.f32.gmra.mxu0 %v255
    %v332 = vpop.f32.mrf.mxu0
    %v333 = vadd.f32 %v236, %v332
    %v334 = vpop.f32.mrf.mxu0
    %335 = vmatprep.mubr.f32.mxu0 0.0
    %336 = vmatmul.mubr.f32.gmra.mxu0 %v258
    %v337 = vpop.f32.mrf.mxu0
    %v338 = vadd.f32 %v241, %v337
    %v339 = vpop.f32.mrf.mxu0
    %340 = vmatprep.mubr.f32.mxu0 0.0
    %341 = vmatmul.mubr.f32.gmra.mxu0 %v261
    %v342 = vpop.f32.mrf.mxu0
    %v343 = vadd.f32 %v246, %v342
    %v344 = vpop.f32.mrf.mxu0
    %345 = vmatprep.mubr.f32.mxu0 0.0
    %346 = vmatmul.mubr.f32.gmra.mxu0 %v264
    %v347 = vpop.f32.mrf.mxu0
    %v348 = vadd.f32 %v251, %v347
    %v349 = vpop.f32.mrf.mxu0
    %350 = vdwg.mxu0
    %v351 = vmax.f32 %v333, 0.0
    %v352 = vmax.f32 %v338, 0.0
    %v353 = vmax.f32 %v343, 0.0
    %v354 = vmax.f32 %v348, 0.0
    %v355 = vld [vmem:[%s5] sm:$0xff]
    %v356 = vld [vmem:[%s6] sm:$0xff]
    %358 = vset.pattern.permute.xlu0 0
    %359 = vperm.xlu0 %358, %v356
    %v360 = vpop.permute.xlu0 %359
    %v363 = vsel %vm87, %v355, 0
    %365 = vmatprep.subr.mxu0 0.0
    %366 = vmatpush1.msra.mxu0 0.0
    %367 = vmatprep.subr.mxu0 0.0
    %368 = vmatpush1.msra.mxu0 0.0
    %369 = vmatprep.subr.mxu0 0.0
    %370 = vmatpush1.msra.mxu0 0.0
    %371 = vmatprep.subr.mxu0 0.0
    %372 = vmatpush1.msra.mxu0 0.0
    %373 = vmatprep.subr.mxu0 0.0
    %374 = vmatpush1.msra.mxu0 0.0
    %375 = vmatprep.subr.mxu0 0.0
    %376 = vmatpush1.msra.mxu0 0.0
    %377 = vmatprep.subr.mxu0 0.0
    %378 = vmatpush1.msra.mxu0 0.0
    %379 = vmatprep.subr.mxu0 0.0
    %380 = vmatpush1.msra.mxu0 0.0
    %381 = vmatprep.subr.mxu0 0.0
    %382 = vmatpush1.msra.mxu0 0.0
    %383 = vmatprep.subr.mxu0 0.0
    %384 = vmatpush1.msra.mxu0 0.0
    %385 = vmatprep.subr.mxu0 0.0
    %386 = vmatpush1.msra.mxu0 0.0
    %387 = vmatprep.subr.mxu0 0.0
    %388 = vmatpush1.msra.mxu0 0.0
    %389 = vmatprep.subr.mxu0 0.0
    %390 = vmatpush1.msra.mxu0 %v354
    %391 = vmatprep.subr.mxu0 0.0
    %392 = vmatpush1.msra.mxu0 %v353
    %393 = vmatprep.subr.mxu0 0.0
    %394 = vmatpush1.msra.mxu0 %v352
    %395 = vmatprep.subr.mxu0 0.0
    %396 = vmatpush1.msra.mxu0 %v351
    %397 = vmatprep.subr.mxu0 0.0
    %398 = vmatpush2.msra.mxu0 0.0
    %399 = vmatprep.subr.mxu0 0.0
    %400 = vmatpush2.msra.mxu0 0.0
    %401 = vmatprep.subr.mxu0 0.0
    %402 = vmatpush2.msra.mxu0 0.0
    %403 = vmatprep.subr.mxu0 0.0
    %404 = vmatpush2.msra.mxu0 0.0
    %405 = vmatprep.subr.mxu0 0.0
    %406 = vmatpush2.msra.mxu0 0.0
    %407 = vmatprep.subr.mxu0 0.0
    %408 = vmatpush2.msra.mxu0 0.0
    %409 = vmatprep.subr.mxu0 0.0
    %410 = vmatpush2.msra.mxu0 0.0
    %411 = vmatprep.subr.mxu0 0.0
    %412 = vmatpush2.msra.mxu0 0.0
    %413 = vmatprep.subr.mxu0 0.0
    %414 = vmatpush2.msra.mxu0 0.0
    %415 = vmatprep.subr.mxu0 0.0
    %416 = vmatpush2.msra.mxu0 0.0
    %417 = vmatprep.subr.mxu0 0.0
    %418 = vmatpush2.msra.mxu0 0.0
    %419 = vmatprep.subr.mxu0 0.0
    %420 = vmatpush2.msra.mxu0 0.0
    %421 = vmatprep.subr.mxu0 0.0
    %422 = vmatpush2.msra.mxu0 0.0
    %423 = vmatprep.subr.mxu0 0.0
    %424 = vmatpush2.msra.mxu0 0.0
    %425 = vmatprep.subr.mxu0 0.0
    %426 = vmatpush2.msra.mxu0 0.0
    %427 = vmatprep.subr.mxu0 0.0
    %428 = vmatpush2.msra.mxu0 0.0
    %429 = vmatprep.mubr.f32.mxu0 0.0
    %430 = vmatmul.mubr.f32.gmra.mxu0 %v363
    %v431 = vpop.f32.mrf.mxu0
    %v432 = vadd.f32 %v360, %v431
    %v433 = vpop.f32.mrf.mxu0
    %434 = vdwg.mxu0
    %v435 = vrot.slane %v432, 4
    %v436 = vmax.f32 %v432, %v435
    %v437 = vrot.slane %v436, 2
    %v438 = vmax.f32 %v436, %v437
    %v439 = vrot.slane %v438, 1
    %v440 = vmax.f32 %v438, %v439
    %v441 = vsub.f32 %v432, %v440
    %v442 = vmul.f32 %v441, 1.442695
    %v443 = vpow.pop %v442
    %v444 = vrot.slane %v443, 4
    %v445 = vadd.f32 %v443, %v444
    %v446 = vrot.slane %v445, 2
    %v447 = vadd.f32 %v445, %v446
    %v448 = vrot.slane %v447, 1
    %v449 = vadd.f32 %v447, %v448
    %v450 = vrcp.pop %v449
    %v451 = vmul.f32 %v443, %v450
    %452 = vst [vmem:[#allocation2] sm:$0xff] %v451
    // Predicated region
    $region30: #{tpu_custom_call.1} parent=1 // pred_check
      _
    $region31: #{tpu_custom_call.1} parent=1 // pred_check_branch
      %454 = sbr.rel (0) target = $region33
    $region32: #{tpu_custom_call.1} parent=1 // pred_region
      %s456 = ssub.s32 128, 128
      %457 = vsyncadd [#allocation3], %s456
      %s459 = sshll.u32 [#allocation2], 4
      %s460 = int_to_ptr.vmem [resolvable:$true] %s459
      %462 = dma.vmem_to_hbm [thread:$0]  %s460, 128, %s7, [#allocation3]
    $region33: #{tpu_custom_call.1} parent=1 // pred_fallthru
      _
    // Predicated region
    $region34: #{tpu_custom_call.1} parent=1 // pred_check
      _
    $region35: #{tpu_custom_call.1} parent=1 // pred_check_branch
      %464 = sbr.rel (0) target = $region37
    $region36: #{tpu_custom_call.1} parent=1 // pred_region
      %465 = dma.done [#allocation3], 128
    $region37: #{tpu_custom_call.1} parent=1 // pred_fallthru
      _
    %466 = vsyncpa [#allocation3], 1

</llo_original>
